<compile_context>
chip_gen: v7x
topology: tpu7x:2x2x1
jax: 0.10.0
libtpu: 0.0.40
codegen_flags: <defaults>
</compile_context>

<pallas_src>
import jax
import jax.numpy as jnp
import numpy as np
from jax import lax
from jax.experimental import pallas as pl
from jax.experimental.pallas import tpu as pltpu

INPUT_SIZE = 41
HIDDEN = 10
OUTPUT = 1
BN_EPS = 1e-5
SUBLANE = 8

# torch LSTM weight rows are gate-ordered [i, f, g, o]; we pack [i, f, o, g]
# so sigmoid covers lanes [0, 3H) and tanh covers lanes [3H, 4H).
_GATE_PERM = (0, 1, 3, 2)


def _lstm_head_kernel(x_ref,        # (T*Bp, D)  bf16, time-major, batch padded to 8
                      wih_f_ref,    # (D, 4H)    bf16 fused fwd input weights  [i|f|o|g]
                      whh_f_ref,    # (H, 4H)    bf16 fused fwd recurrent weights
                      b_f_ref,      # (1, 4H)    f32  fused fwd bias (b_ih + b_hh)
                      wih_b_ref,    # (D, 4H)    bf16 fused reverse input weights
                      b_b_ref,      # (1, 4H)    f32  fused reverse bias
                      wfc_ref,      # (2H, O)    f32  BN-folded fc weights [fwd; bwd]
                      bfc_ref,      # (1, O)     f32  BN-folded fc bias
                      out_ref):     # (Bp, O)    f32
    H = whh_f_ref.shape[0]
    G = 4 * H
    Bp = out_ref.shape[0]
    T = x_ref.shape[0] // Bp

    lane = lax.broadcasted_iota(jnp.int32, (Bp, G), 1)
    sig_mask = lane < 3 * H                 # [i|f|o] -> sigmoid, [g] -> tanh

    def gate_act(pre):
        # tanh(x) = 2*sigmoid(2x) - 1: ONE EUP traversal over the whole packed
        # (Bp,4H) slab; the g-lane fix-up is two cheap VPU ops.
        scaled = jnp.where(sig_mask, pre, 2.0 * pre)
        s = jax.nn.sigmoid(scaled)
        return jnp.where(sig_mask, s, 2.0 * s - 1.0)

    xv = x_ref[...]                         # tiny; lives in vregs
    whh = whh_f_ref[...]                    # hoisted out of the recurrence

    # Hoisted input projection covering every timestep: one bf16 MXU matmul,
    # f32 accumulation, kept register-resident (no VMEM scratch round trip).
    xg = (jnp.dot(xv, wih_f_ref[...], preferred_element_type=jnp.float32)
          + b_f_ref[...])

    h = jnp.zeros((Bp, H), jnp.float32)
    c = jnp.zeros((Bp, H), jnp.float32)
    # T is small & static: static unroll; every row offset is a multiple of
    # Bp == 8, so all per-step slices are sublane-aligned.
    for t in range(T):
        pre = xg[t * Bp:(t + 1) * Bp, :] + jnp.dot(
            h.astype(jnp.bfloat16), whh, preferred_element_type=jnp.float32)
        act = gate_act(pre)
        # TODO(synk): ~3 XLU lane rotates/step for i/f/o/g extraction; a
        # rotate-minimal packed-state layout is possible but marginal at H=10.
        i = act[:, 0:H]
        f = act[:, H:2 * H]
        o = act[:, 2 * H:3 * H]
        g = act[:, 3 * H:4 * H]
        c = f * c + i * g
        h = o * jnp.tanh(c)                 # all elementwise math stays f32
    h_fwd = h

    # Reverse direction at position T-1 == its FIRST step from zero state:
    # h0 @ W_hh_b == 0 and f * c0 == 0, so only the input projection remains.
    x_last = xv[(T - 1) * Bp:T * Bp, :]
    pre_b = (jnp.dot(x_last, wih_b_ref[...],
                     preferred_element_type=jnp.float32) + b_b_ref[...])
    act_b = gate_act(pre_b)
    h_bwd = act_b[:, 2 * H:3 * H] * jnp.tanh(act_b[:, 0:H] * act_b[:, 3 * H:4 * H])

    # Fused head: BatchNorm already folded into fc in the wrapper; one dot.
    hcat = jnp.concatenate([h_fwd, h_bwd], axis=1)            # (Bp, 2H)
    logits = (jnp.dot(hcat, wfc_ref[...], preferred_element_type=jnp.float32)
              + bfc_ref[...])
    out_ref[...] = jax.nn.sigmoid(logits)


def _fuse_gate_weights(w, hidden):
    """torch (4H, X) with row blocks [i; f; g; o] -> (X, 4H) with cols [i|f|o|g]."""
    per_gate = w.reshape(4, hidden, -1)[jnp.array(_GATE_PERM)]   # (4, H, X)
    return jnp.transpose(per_gate, (2, 0, 1)).reshape(w.shape[1], 4 * hidden)


def _fuse_gate_bias(b, hidden):
    return b.reshape(4, hidden)[jnp.array(_GATE_PERM)].reshape(1, 4 * hidden)


def lstm_forward(x, p, hidden=HIDDEN):
    """x: (B, T, D) batch-first, like the PyTorch module's input_seq."""
    B, T, D = x.shape
    Bp = ((B + SUBLANE - 1) // SUBLANE) * SUBLANE     # pad batch to 8 sublanes

    # time-major, zero-pad the batch, flatten; bf16 for single-pass MXU issue.
    xt = jnp.transpose(x, (1, 0, 2)).astype(jnp.float32)         # (T, B, D)
    xt = jnp.pad(xt, ((0, 0), (0, Bp - B), (0, 0)))              # (T, Bp, D)
    x2d = xt.reshape(T * Bp, D).astype(jnp.bfloat16)

    # Fold eval-mode BatchNorm1d into the fc layer (pure weight constant-folding).
    scale = p["gamma"] * lax.rsqrt(p["rvar"] + BN_EPS)           # (2H,)
    shift = p["beta"] - p["rmean"] * scale                       # (2H,)
    w_eff = p["w_fc"] * scale[None, :]                           # (O, 2H)
    b_eff = p["b_fc"] + p["w_fc"] @ shift                        # (O,)

    args = (
        x2d,
        _fuse_gate_weights(p["w_ih_f"], hidden).astype(jnp.bfloat16),
        _fuse_gate_weights(p["w_hh_f"], hidden).astype(jnp.bfloat16),
        _fuse_gate_bias(p["b_f"], hidden),
        _fuse_gate_weights(p["w_ih_b"], hidden).astype(jnp.bfloat16),
        _fuse_gate_bias(p["b_b"], hidden),
        jnp.transpose(w_eff),                                    # (2H, O) f32
        b_eff.reshape(1, OUTPUT),                                # (1, O)  f32
    )
    vmem = pl.BlockSpec(memory_space=pltpu.MemorySpace.VMEM)
    out_padded = pl.pallas_call(
        _lstm_head_kernel,
        out_shape=jax.ShapeDtypeStruct((Bp, OUTPUT), jnp.float32),
        in_specs=[vmem] * len(args),
        out_specs=vmem,
    )(*args)
    return out_padded[:B]


def init_params(key, input_size=INPUT_SIZE, hidden=HIDDEN, output=OUTPUT):
    ks = jax.random.split(key, 10)
    stdv = 1.0 / np.sqrt(hidden)

    def u(k, shape, s):
        return jax.random.uniform(k, shape, jnp.float32, minval=-s, maxval=s)

    # nn.LSTM parameter shapes: W_ih (4H, D), W_hh (4H, H), b_ih + b_hh (4H,)
    w_ih_f = u(ks[0], (4 * hidden, input_size), stdv)
    w_hh_f = u(ks[1], (4 * hidden, hidden), stdv)
    b_f = u(ks[2], (4 * hidden,), stdv) + u(ks[3], (4 * hidden,), stdv)
    w_ih_b = u(ks[4], (4 * hidden, input_size), stdv)
    w_hh_b = u(ks[5], (4 * hidden, hidden), stdv)
    b_b = u(ks[6], (4 * hidden,), stdv) + u(ks[7], (4 * hidden,), stdv)
    # nn.BatchNorm1d(2H): fresh-module defaults (deterministic).
    gamma = jnp.ones((2 * hidden,), jnp.float32)
    beta = jnp.zeros((2 * hidden,), jnp.float32)
    rmean = jnp.zeros((2 * hidden,), jnp.float32)
    rvar = jnp.ones((2 * hidden,), jnp.float32)
    # nn.Linear(2H, 1)
    s_fc = 1.0 / np.sqrt(2 * hidden)
    w_fc = u(ks[8], (output, 2 * hidden), s_fc)
    b_fc = u(ks[9], (output,), s_fc)
    return dict(w_ih_f=w_ih_f, w_hh_f=w_hh_f, b_f=b_f,
                w_ih_b=w_ih_b, w_hh_b=w_hh_b, b_b=b_b,
                gamma=gamma, beta=beta, rmean=rmean, rvar=rvar,
                w_fc=w_fc, b_fc=b_fc)


def reference_forward(x, p, hidden=HIDDEN):
    """Pure-JAX f32 reference matching torch semantics (eval mode)."""
    B, T, D = x.shape

    def cell(x_t, h, c, w_ih, w_hh, b):
        gates = x_t @ w_ih.T + h @ w_hh.T + b
        i, f, g, o = jnp.split(gates, 4, axis=-1)
        i, f, o = jax.nn.sigmoid(i), jax.nn.sigmoid(f), jax.nn.sigmoid(o)
        g = jnp.tanh(g)
        c = f * c + i * g
        h = o * jnp.tanh(c)
        return h, c

    h = jnp.zeros((B, hidden)); c = jnp.zeros((B, hidden))
    for t in range(T):
        h, c = cell(x[:, t], h, c, p["w_ih_f"], p["w_hh_f"], p["b_f"])
    h_fwd = h

    hb = jnp.zeros((B, hidden)); cb = jnp.zeros((B, hidden))
    h_bwd_at_last = None
    for t in range(T - 1, -1, -1):      # full reverse scan; keep state at pos T-1
        hb, cb = cell(x[:, t], hb, cb, p["w_ih_b"], p["w_hh_b"], p["b_b"])
        if t == T - 1:
            h_bwd_at_last = hb

    last = jnp.concatenate([h_fwd, h_bwd_at_last], axis=-1)     # (B, 2H)
    bn = (last - p["rmean"]) / jnp.sqrt(p["rvar"] + BN_EPS) * p["gamma"] + p["beta"]
    out = bn @ p["w_fc"].T + p["b_fc"]
    return jax.nn.sigmoid(out)


if __name__ == "__main__":
    key = jax.random.PRNGKey(0)
    pkey, xkey = jax.random.split(key)
    params = init_params(pkey)

    B, T = 4, 8
    x = jax.random.normal(xkey, (B, T, INPUT_SIZE), jnp.float32)

    out = lstm_forward(x, params)
    out = jax.block_until_ready(out)
    assert out.shape == (B, OUTPUT)

    ref = reference_forward(x, params)
    # Tolerance loosened slightly vs the all-f32 version: MXU operands are bf16
    # (f32 accumulation, f32 elementwise), and the recurrent dot's rounding
    # compounds over T steps.
    np.testing.assert_allclose(np.asarray(out), np.asarray(ref), rtol=5e-3, atol=5e-3)

    print("KERNEL_OK")
</pallas_src>

<mosaic_0001>
module attributes {stable_mosaic.version = 11 : i64} {
  func.func @_lstm_head_kernel(%arg0: memref<64x41xbf16, #tpu.memory_space<vmem>>, %arg1: memref<41x40xbf16, #tpu.memory_space<vmem>>, %arg2: memref<10x40xbf16, #tpu.memory_space<vmem>>, %arg3: memref<1x40xf32, #tpu.memory_space<vmem>>, %arg4: memref<41x40xbf16, #tpu.memory_space<vmem>>, %arg5: memref<1x40xf32, #tpu.memory_space<vmem>>, %arg6: memref<20x1xf32, #tpu.memory_space<vmem>>, %arg7: memref<1x1xf32, #tpu.memory_space<vmem>>, %arg8: memref<8x1xf32, #tpu.memory_space<vmem>>) attributes {dimension_semantics = [], scalar_prefetch = 0 : i64, scratch_operands = 0 : i64, tpu.core_type = #tpu.core_type<tc>} {
    %0 = tpu.iota {dimensions = array<i32: 1>} : vector<8x40xi32>
    %c30_i32 = arith.constant 30 : i32
    %1 = vector.broadcast %c30_i32 : i32 to vector<8x40xi32>
    %2 = arith.cmpi slt, %0, %1 : vector<8x40xi32>
    %c0 = arith.constant 0 : index
    %c0_0 = arith.constant 0 : index
    %3 = vector.load %arg0[%c0, %c0_0] : memref<64x41xbf16, #tpu.memory_space<vmem>>, vector<64x41xbf16>
    %c0_1 = arith.constant 0 : index
    %c0_2 = arith.constant 0 : index
    %4 = vector.load %arg2[%c0_1, %c0_2] : memref<10x40xbf16, #tpu.memory_space<vmem>>, vector<10x40xbf16>
    %c0_3 = arith.constant 0 : index
    %c0_4 = arith.constant 0 : index
    %5 = vector.load %arg1[%c0_3, %c0_4] : memref<41x40xbf16, #tpu.memory_space<vmem>>, vector<41x40xbf16>
    %cst = arith.constant dense<0.000000e+00> : vector<64x40xf32>
    %6 = tpu.matmul %3, %5, %cst {dimension_numbers = #tpu.dot_dimension_numbers<[1], [0], [0], [1], [0, 0, 1, 1], [], []>} : vector<64x41xbf16>, vector<41x40xbf16>, vector<64x40xf32> -> vector<64x40xf32>
    %c0_5 = arith.constant 0 : index
    %c0_6 = arith.constant 0 : index
    %7 = vector.load %arg3[%c0_5, %c0_6] : memref<1x40xf32, #tpu.memory_space<vmem>>, vector<1x40xf32>
    %8 = vector.broadcast %7 : vector<1x40xf32> to vector<64x40xf32>
    %9 = arith.addf %6, %8 : vector<64x40xf32>
    %cst_7 = arith.constant 0.000000e+00 : f32
    %10 = vector.broadcast %cst_7 : f32 to vector<8x10xf32>
    %cst_8 = arith.constant 0.000000e+00 : f32
    %11 = vector.broadcast %cst_8 : f32 to vector<8x10xf32>
    %12 = vector.extract_strided_slice %9 {offsets = [0, 0], sizes = [8, 40], strides = [1, 1]} : vector<64x40xf32> to vector<8x40xf32>
    %13 = arith.truncf %10 : vector<8x10xf32> to vector<8x10xbf16>
    %cst_9 = arith.constant dense<0.000000e+00> : vector<8x40xf32>
    %14 = tpu.matmul %13, %4, %cst_9 {dimension_numbers = #tpu.dot_dimension_numbers<[1], [0], [0], [1], [0, 0, 1, 1], [], []>} : vector<8x10xbf16>, vector<10x40xbf16>, vector<8x40xf32> -> vector<8x40xf32>
    %15 = arith.addf %12, %14 : vector<8x40xf32>
    %cst_10 = arith.constant 2.000000e+00 : f32
    %16 = vector.broadcast %cst_10 : f32 to vector<8x40xf32>
    %17 = arith.mulf %16, %15 : vector<8x40xf32>
    %18 = arith.select %2, %15, %17 : vector<8x40xi1>, vector<8x40xf32>
    %19 = arith.negf %18 : vector<8x40xf32>
    %20 = math.exp %19 : vector<8x40xf32>
    %cst_11 = arith.constant 1.000000e+00 : f32
    %21 = vector.broadcast %cst_11 : f32 to vector<8x40xf32>
    %22 = arith.addf %21, %20 : vector<8x40xf32>
    %23 = arith.divf %21, %22 : vector<8x40xf32>
    %cst_12 = arith.constant 2.000000e+00 : f32
    %24 = vector.broadcast %cst_12 : f32 to vector<8x40xf32>
    %25 = arith.mulf %24, %23 : vector<8x40xf32>
    %cst_13 = arith.constant 1.000000e+00 : f32
    %26 = vector.broadcast %cst_13 : f32 to vector<8x40xf32>
    %27 = arith.subf %25, %26 : vector<8x40xf32>
    %28 = arith.select %2, %23, %27 : vector<8x40xi1>, vector<8x40xf32>
    %29 = vector.extract_strided_slice %28 {offsets = [0, 0], sizes = [8, 10], strides = [1, 1]} : vector<8x40xf32> to vector<8x10xf32>
    %30 = vector.extract_strided_slice %28 {offsets = [0, 10], sizes = [8, 10], strides = [1, 1]} : vector<8x40xf32> to vector<8x10xf32>
    %31 = vector.extract_strided_slice %28 {offsets = [0, 20], sizes = [8, 10], strides = [1, 1]} : vector<8x40xf32> to vector<8x10xf32>
    %32 = vector.extract_strided_slice %28 {offsets = [0, 30], sizes = [8, 10], strides = [1, 1]} : vector<8x40xf32> to vector<8x10xf32>
    %33 = arith.mulf %30, %11 : vector<8x10xf32>
    %34 = arith.mulf %29, %32 : vector<8x10xf32>
    %35 = arith.addf %33, %34 : vector<8x10xf32>
    %36 = math.tanh %35 : vector<8x10xf32>
    %37 = arith.mulf %31, %36 : vector<8x10xf32>
    %38 = vector.extract_strided_slice %9 {offsets = [8, 0], sizes = [8, 40], strides = [1, 1]} : vector<64x40xf32> to vector<8x40xf32>
    %39 = arith.truncf %37 : vector<8x10xf32> to vector<8x10xbf16>
    %cst_14 = arith.constant dense<0.000000e+00> : vector<8x40xf32>
    %40 = tpu.matmul %39, %4, %cst_14 {dimension_numbers = #tpu.dot_dimension_numbers<[1], [0], [0], [1], [0, 0, 1, 1], [], []>} : vector<8x10xbf16>, vector<10x40xbf16>, vector<8x40xf32> -> vector<8x40xf32>
    %41 = arith.addf %38, %40 : vector<8x40xf32>
    %cst_15 = arith.constant 2.000000e+00 : f32
    %42 = vector.broadcast %cst_15 : f32 to vector<8x40xf32>
    %43 = arith.mulf %42, %41 : vector<8x40xf32>
    %44 = arith.select %2, %41, %43 : vector<8x40xi1>, vector<8x40xf32>
    %45 = arith.negf %44 : vector<8x40xf32>
    %46 = math.exp %45 : vector<8x40xf32>
    %cst_16 = arith.constant 1.000000e+00 : f32
    %47 = vector.broadcast %cst_16 : f32 to vector<8x40xf32>
    %48 = arith.addf %47, %46 : vector<8x40xf32>
    %49 = arith.divf %47, %48 : vector<8x40xf32>
    %cst_17 = arith.constant 2.000000e+00 : f32
    %50 = vector.broadcast %cst_17 : f32 to vector<8x40xf32>
    %51 = arith.mulf %50, %49 : vector<8x40xf32>
    %cst_18 = arith.constant 1.000000e+00 : f32
    %52 = vector.broadcast %cst_18 : f32 to vector<8x40xf32>
    %53 = arith.subf %51, %52 : vector<8x40xf32>
    %54 = arith.select %2, %49, %53 : vector<8x40xi1>, vector<8x40xf32>
    %55 = vector.extract_strided_slice %54 {offsets = [0, 0], sizes = [8, 10], strides = [1, 1]} : vector<8x40xf32> to vector<8x10xf32>
    %56 = vector.extract_strided_slice %54 {offsets = [0, 10], sizes = [8, 10], strides = [1, 1]} : vector<8x40xf32> to vector<8x10xf32>
    %57 = vector.extract_strided_slice %54 {offsets = [0, 20], sizes = [8, 10], strides = [1, 1]} : vector<8x40xf32> to vector<8x10xf32>
    %58 = vector.extract_strided_slice %54 {offsets = [0, 30], sizes = [8, 10], strides = [1, 1]} : vector<8x40xf32> to vector<8x10xf32>
    %59 = arith.mulf %56, %35 : vector<8x10xf32>
    %60 = arith.mulf %55, %58 : vector<8x10xf32>
    %61 = arith.addf %59, %60 : vector<8x10xf32>
    %62 = math.tanh %61 : vector<8x10xf32>
    %63 = arith.mulf %57, %62 : vector<8x10xf32>
    %64 = vector.extract_strided_slice %9 {offsets = [16, 0], sizes = [8, 40], strides = [1, 1]} : vector<64x40xf32> to vector<8x40xf32>
    %65 = arith.truncf %63 : vector<8x10xf32> to vector<8x10xbf16>
    %cst_19 = arith.constant dense<0.000000e+00> : vector<8x40xf32>
    %66 = tpu.matmul %65, %4, %cst_19 {dimension_numbers = #tpu.dot_dimension_numbers<[1], [0], [0], [1], [0, 0, 1, 1], [], []>} : vector<8x10xbf16>, vector<10x40xbf16>, vector<8x40xf32> -> vector<8x40xf32>
    %67 = arith.addf %64, %66 : vector<8x40xf32>
    %cst_20 = arith.constant 2.000000e+00 : f32
    %68 = vector.broadcast %cst_20 : f32 to vector<8x40xf32>
    %69 = arith.mulf %68, %67 : vector<8x40xf32>
    %70 = arith.select %2, %67, %69 : vector<8x40xi1>, vector<8x40xf32>
    %71 = arith.negf %70 : vector<8x40xf32>
    %72 = math.exp %71 : vector<8x40xf32>
    %cst_21 = arith.constant 1.000000e+00 : f32
    %73 = vector.broadcast %cst_21 : f32 to vector<8x40xf32>
    %74 = arith.addf %73, %72 : vector<8x40xf32>
    %75 = arith.divf %73, %74 : vector<8x40xf32>
    %cst_22 = arith.constant 2.000000e+00 : f32
    %76 = vector.broadcast %cst_22 : f32 to vector<8x40xf32>
    %77 = arith.mulf %76, %75 : vector<8x40xf32>
    %cst_23 = arith.constant 1.000000e+00 : f32
    %78 = vector.broadcast %cst_23 : f32 to vector<8x40xf32>
    %79 = arith.subf %77, %78 : vector<8x40xf32>
    %80 = arith.select %2, %75, %79 : vector<8x40xi1>, vector<8x40xf32>
    %81 = vector.extract_strided_slice %80 {offsets = [0, 0], sizes = [8, 10], strides = [1, 1]} : vector<8x40xf32> to vector<8x10xf32>
    %82 = vector.extract_strided_slice %80 {offsets = [0, 10], sizes = [8, 10], strides = [1, 1]} : vector<8x40xf32> to vector<8x10xf32>
    %83 = vector.extract_strided_slice %80 {offsets = [0, 20], sizes = [8, 10], strides = [1, 1]} : vector<8x40xf32> to vector<8x10xf32>
    %84 = vector.extract_strided_slice %80 {offsets = [0, 30], sizes = [8, 10], strides = [1, 1]} : vector<8x40xf32> to vector<8x10xf32>
    %85 = arith.mulf %82, %61 : vector<8x10xf32>
    %86 = arith.mulf %81, %84 : vector<8x10xf32>
    %87 = arith.addf %85, %86 : vector<8x10xf32>
    %88 = math.tanh %87 : vector<8x10xf32>
    %89 = arith.mulf %83, %88 : vector<8x10xf32>
    %90 = vector.extract_strided_slice %9 {offsets = [24, 0], sizes = [8, 40], strides = [1, 1]} : vector<64x40xf32> to vector<8x40xf32>
    %91 = arith.truncf %89 : vector<8x10xf32> to vector<8x10xbf16>
    %cst_24 = arith.constant dense<0.000000e+00> : vector<8x40xf32>
    %92 = tpu.matmul %91, %4, %cst_24 {dimension_numbers = #tpu.dot_dimension_numbers<[1], [0], [0], [1], [0, 0, 1, 1], [], []>} : vector<8x10xbf16>, vector<10x40xbf16>, vector<8x40xf32> -> vector<8x40xf32>
    %93 = arith.addf %90, %92 : vector<8x40xf32>
    %cst_25 = arith.constant 2.000000e+00 : f32
    %94 = vector.broadcast %cst_25 : f32 to vector<8x40xf32>
    %95 = arith.mulf %94, %93 : vector<8x40xf32>
    %96 = arith.select %2, %93, %95 : vector<8x40xi1>, vector<8x40xf32>
    %97 = arith.negf %96 : vector<8x40xf32>
    %98 = math.exp %97 : vector<8x40xf32>
    %cst_26 = arith.constant 1.000000e+00 : f32
    %99 = vector.broadcast %cst_26 : f32 to vector<8x40xf32>
    %100 = arith.addf %99, %98 : vector<8x40xf32>
    %101 = arith.divf %99, %100 : vector<8x40xf32>
    %cst_27 = arith.constant 2.000000e+00 : f32
    %102 = vector.broadcast %cst_27 : f32 to vector<8x40xf32>
    %103 = arith.mulf %102, %101 : vector<8x40xf32>
    %cst_28 = arith.constant 1.000000e+00 : f32
    %104 = vector.broadcast %cst_28 : f32 to vector<8x40xf32>
    %105 = arith.subf %103, %104 : vector<8x40xf32>
    %106 = arith.select %2, %101, %105 : vector<8x40xi1>, vector<8x40xf32>
    %107 = vector.extract_strided_slice %106 {offsets = [0, 0], sizes = [8, 10], strides = [1, 1]} : vector<8x40xf32> to vector<8x10xf32>
    %108 = vector.extract_strided_slice %106 {offsets = [0, 10], sizes = [8, 10], strides = [1, 1]} : vector<8x40xf32> to vector<8x10xf32>
    %109 = vector.extract_strided_slice %106 {offsets = [0, 20], sizes = [8, 10], strides = [1, 1]} : vector<8x40xf32> to vector<8x10xf32>
    %110 = vector.extract_strided_slice %106 {offsets = [0, 30], sizes = [8, 10], strides = [1, 1]} : vector<8x40xf32> to vector<8x10xf32>
    %111 = arith.mulf %108, %87 : vector<8x10xf32>
    %112 = arith.mulf %107, %110 : vector<8x10xf32>
    %113 = arith.addf %111, %112 : vector<8x10xf32>
    %114 = math.tanh %113 : vector<8x10xf32>
    %115 = arith.mulf %109, %114 : vector<8x10xf32>
    %116 = vector.extract_strided_slice %9 {offsets = [32, 0], sizes = [8, 40], strides = [1, 1]} : vector<64x40xf32> to vector<8x40xf32>
    %117 = arith.truncf %115 : vector<8x10xf32> to vector<8x10xbf16>
    %cst_29 = arith.constant dense<0.000000e+00> : vector<8x40xf32>
    %118 = tpu.matmul %117, %4, %cst_29 {dimension_numbers = #tpu.dot_dimension_numbers<[1], [0], [0], [1], [0, 0, 1, 1], [], []>} : vector<8x10xbf16>, vector<10x40xbf16>, vector<8x40xf32> -> vector<8x40xf32>
    %119 = arith.addf %116, %118 : vector<8x40xf32>
    %cst_30 = arith.constant 2.000000e+00 : f32
    %120 = vector.broadcast %cst_30 : f32 to vector<8x40xf32>
    %121 = arith.mulf %120, %119 : vector<8x40xf32>
    %122 = arith.select %2, %119, %121 : vector<8x40xi1>, vector<8x40xf32>
    %123 = arith.negf %122 : vector<8x40xf32>
    %124 = math.exp %123 : vector<8x40xf32>
    %cst_31 = arith.constant 1.000000e+00 : f32
    %125 = vector.broadcast %cst_31 : f32 to vector<8x40xf32>
    %126 = arith.addf %125, %124 : vector<8x40xf32>
    %127 = arith.divf %125, %126 : vector<8x40xf32>
    %cst_32 = arith.constant 2.000000e+00 : f32
    %128 = vector.broadcast %cst_32 : f32 to vector<8x40xf32>
    %129 = arith.mulf %128, %127 : vector<8x40xf32>
    %cst_33 = arith.constant 1.000000e+00 : f32
    %130 = vector.broadcast %cst_33 : f32 to vector<8x40xf32>
    %131 = arith.subf %129, %130 : vector<8x40xf32>
    %132 = arith.select %2, %127, %131 : vector<8x40xi1>, vector<8x40xf32>
    %133 = vector.extract_strided_slice %132 {offsets = [0, 0], sizes = [8, 10], strides = [1, 1]} : vector<8x40xf32> to vector<8x10xf32>
    %134 = vector.extract_strided_slice %132 {offsets = [0, 10], sizes = [8, 10], strides = [1, 1]} : vector<8x40xf32> to vector<8x10xf32>
    %135 = vector.extract_strided_slice %132 {offsets = [0, 20], sizes = [8, 10], strides = [1, 1]} : vector<8x40xf32> to vector<8x10xf32>
    %136 = vector.extract_strided_slice %132 {offsets = [0, 30], sizes = [8, 10], strides = [1, 1]} : vector<8x40xf32> to vector<8x10xf32>
    %137 = arith.mulf %134, %113 : vector<8x10xf32>
    %138 = arith.mulf %133, %136 : vector<8x10xf32>
    %139 = arith.addf %137, %138 : vector<8x10xf32>
    %140 = math.tanh %139 : vector<8x10xf32>
    %141 = arith.mulf %135, %140 : vector<8x10xf32>
    %142 = vector.extract_strided_slice %9 {offsets = [40, 0], sizes = [8, 40], strides = [1, 1]} : vector<64x40xf32> to vector<8x40xf32>
    %143 = arith.truncf %141 : vector<8x10xf32> to vector<8x10xbf16>
    %cst_34 = arith.constant dense<0.000000e+00> : vector<8x40xf32>
    %144 = tpu.matmul %143, %4, %cst_34 {dimension_numbers = #tpu.dot_dimension_numbers<[1], [0], [0], [1], [0, 0, 1, 1], [], []>} : vector<8x10xbf16>, vector<10x40xbf16>, vector<8x40xf32> -> vector<8x40xf32>
    %145 = arith.addf %142, %144 : vector<8x40xf32>
    %cst_35 = arith.constant 2.000000e+00 : f32
    %146 = vector.broadcast %cst_35 : f32 to vector<8x40xf32>
    %147 = arith.mulf %146, %145 : vector<8x40xf32>
    %148 = arith.select %2, %145, %147 : vector<8x40xi1>, vector<8x40xf32>
    %149 = arith.negf %148 : vector<8x40xf32>
    %150 = math.exp %149 : vector<8x40xf32>
    %cst_36 = arith.constant 1.000000e+00 : f32
    %151 = vector.broadcast %cst_36 : f32 to vector<8x40xf32>
    %152 = arith.addf %151, %150 : vector<8x40xf32>
    %153 = arith.divf %151, %152 : vector<8x40xf32>
    %cst_37 = arith.constant 2.000000e+00 : f32
    %154 = vector.broadcast %cst_37 : f32 to vector<8x40xf32>
    %155 = arith.mulf %154, %153 : vector<8x40xf32>
    %cst_38 = arith.constant 1.000000e+00 : f32
    %156 = vector.broadcast %cst_38 : f32 to vector<8x40xf32>
    %157 = arith.subf %155, %156 : vector<8x40xf32>
    %158 = arith.select %2, %153, %157 : vector<8x40xi1>, vector<8x40xf32>
    %159 = vector.extract_strided_slice %158 {offsets = [0, 0], sizes = [8, 10], strides = [1, 1]} : vector<8x40xf32> to vector<8x10xf32>
    %160 = vector.extract_strided_slice %158 {offsets = [0, 10], sizes = [8, 10], strides = [1, 1]} : vector<8x40xf32> to vector<8x10xf32>
    %161 = vector.extract_strided_slice %158 {offsets = [0, 20], sizes = [8, 10], strides = [1, 1]} : vector<8x40xf32> to vector<8x10xf32>
    %162 = vector.extract_strided_slice %158 {offsets = [0, 30], sizes = [8, 10], strides = [1, 1]} : vector<8x40xf32> to vector<8x10xf32>
    %163 = arith.mulf %160, %139 : vector<8x10xf32>
    %164 = arith.mulf %159, %162 : vector<8x10xf32>
    %165 = arith.addf %163, %164 : vector<8x10xf32>
    %166 = math.tanh %165 : vector<8x10xf32>
    %167 = arith.mulf %161, %166 : vector<8x10xf32>
    %168 = vector.extract_strided_slice %9 {offsets = [48, 0], sizes = [8, 40], strides = [1, 1]} : vector<64x40xf32> to vector<8x40xf32>
    %169 = arith.truncf %167 : vector<8x10xf32> to vector<8x10xbf16>
    %cst_39 = arith.constant dense<0.000000e+00> : vector<8x40xf32>
    %170 = tpu.matmul %169, %4, %cst_39 {dimension_numbers = #tpu.dot_dimension_numbers<[1], [0], [0], [1], [0, 0, 1, 1], [], []>} : vector<8x10xbf16>, vector<10x40xbf16>, vector<8x40xf32> -> vector<8x40xf32>
    %171 = arith.addf %168, %170 : vector<8x40xf32>
    %cst_40 = arith.constant 2.000000e+00 : f32
    %172 = vector.broadcast %cst_40 : f32 to vector<8x40xf32>
    %173 = arith.mulf %172, %171 : vector<8x40xf32>
    %174 = arith.select %2, %171, %173 : vector<8x40xi1>, vector<8x40xf32>
    %175 = arith.negf %174 : vector<8x40xf32>
    %176 = math.exp %175 : vector<8x40xf32>
    %cst_41 = arith.constant 1.000000e+00 : f32
    %177 = vector.broadcast %cst_41 : f32 to vector<8x40xf32>
    %178 = arith.addf %177, %176 : vector<8x40xf32>
    %179 = arith.divf %177, %178 : vector<8x40xf32>
    %cst_42 = arith.constant 2.000000e+00 : f32
    %180 = vector.broadcast %cst_42 : f32 to vector<8x40xf32>
    %181 = arith.mulf %180, %179 : vector<8x40xf32>
    %cst_43 = arith.constant 1.000000e+00 : f32
    %182 = vector.broadcast %cst_43 : f32 to vector<8x40xf32>
    %183 = arith.subf %181, %182 : vector<8x40xf32>
    %184 = arith.select %2, %179, %183 : vector<8x40xi1>, vector<8x40xf32>
    %185 = vector.extract_strided_slice %184 {offsets = [0, 0], sizes = [8, 10], strides = [1, 1]} : vector<8x40xf32> to vector<8x10xf32>
    %186 = vector.extract_strided_slice %184 {offsets = [0, 10], sizes = [8, 10], strides = [1, 1]} : vector<8x40xf32> to vector<8x10xf32>
    %187 = vector.extract_strided_slice %184 {offsets = [0, 20], sizes = [8, 10], strides = [1, 1]} : vector<8x40xf32> to vector<8x10xf32>
    %188 = vector.extract_strided_slice %184 {offsets = [0, 30], sizes = [8, 10], strides = [1, 1]} : vector<8x40xf32> to vector<8x10xf32>
    %189 = arith.mulf %186, %165 : vector<8x10xf32>
    %190 = arith.mulf %185, %188 : vector<8x10xf32>
    %191 = arith.addf %189, %190 : vector<8x10xf32>
    %192 = math.tanh %191 : vector<8x10xf32>
    %193 = arith.mulf %187, %192 : vector<8x10xf32>
    %194 = vector.extract_strided_slice %9 {offsets = [56, 0], sizes = [8, 40], strides = [1, 1]} : vector<64x40xf32> to vector<8x40xf32>
    %195 = arith.truncf %193 : vector<8x10xf32> to vector<8x10xbf16>
    %cst_44 = arith.constant dense<0.000000e+00> : vector<8x40xf32>
    %196 = tpu.matmul %195, %4, %cst_44 {dimension_numbers = #tpu.dot_dimension_numbers<[1], [0], [0], [1], [0, 0, 1, 1], [], []>} : vector<8x10xbf16>, vector<10x40xbf16>, vector<8x40xf32> -> vector<8x40xf32>
    %197 = arith.addf %194, %196 : vector<8x40xf32>
    %cst_45 = arith.constant 2.000000e+00 : f32
    %198 = vector.broadcast %cst_45 : f32 to vector<8x40xf32>
    %199 = arith.mulf %198, %197 : vector<8x40xf32>
    %200 = arith.select %2, %197, %199 : vector<8x40xi1>, vector<8x40xf32>
    %201 = arith.negf %200 : vector<8x40xf32>
    %202 = math.exp %201 : vector<8x40xf32>
    %cst_46 = arith.constant 1.000000e+00 : f32
    %203 = vector.broadcast %cst_46 : f32 to vector<8x40xf32>
    %204 = arith.addf %203, %202 : vector<8x40xf32>
    %205 = arith.divf %203, %204 : vector<8x40xf32>
    %cst_47 = arith.constant 2.000000e+00 : f32
    %206 = vector.broadcast %cst_47 : f32 to vector<8x40xf32>
    %207 = arith.mulf %206, %205 : vector<8x40xf32>
    %cst_48 = arith.constant 1.000000e+00 : f32
    %208 = vector.broadcast %cst_48 : f32 to vector<8x40xf32>
    %209 = arith.subf %207, %208 : vector<8x40xf32>
    %210 = arith.select %2, %205, %209 : vector<8x40xi1>, vector<8x40xf32>
    %211 = vector.extract_strided_slice %210 {offsets = [0, 0], sizes = [8, 10], strides = [1, 1]} : vector<8x40xf32> to vector<8x10xf32>
    %212 = vector.extract_strided_slice %210 {offsets = [0, 10], sizes = [8, 10], strides = [1, 1]} : vector<8x40xf32> to vector<8x10xf32>
    %213 = vector.extract_strided_slice %210 {offsets = [0, 20], sizes = [8, 10], strides = [1, 1]} : vector<8x40xf32> to vector<8x10xf32>
    %214 = vector.extract_strided_slice %210 {offsets = [0, 30], sizes = [8, 10], strides = [1, 1]} : vector<8x40xf32> to vector<8x10xf32>
    %215 = arith.mulf %212, %191 : vector<8x10xf32>
    %216 = arith.mulf %211, %214 : vector<8x10xf32>
    %217 = arith.addf %215, %216 : vector<8x10xf32>
    %218 = math.tanh %217 : vector<8x10xf32>
    %219 = arith.mulf %213, %218 : vector<8x10xf32>
    %220 = vector.extract_strided_slice %3 {offsets = [56, 0], sizes = [8, 41], strides = [1, 1]} : vector<64x41xbf16> to vector<8x41xbf16>
    %c0_49 = arith.constant 0 : index
    %c0_50 = arith.constant 0 : index
    %221 = vector.load %arg4[%c0_49, %c0_50] : memref<41x40xbf16, #tpu.memory_space<vmem>>, vector<41x40xbf16>
    %cst_51 = arith.constant dense<0.000000e+00> : vector<8x40xf32>
    %222 = tpu.matmul %220, %221, %cst_51 {dimension_numbers = #tpu.dot_dimension_numbers<[1], [0], [0], [1], [0, 0, 1, 1], [], []>} : vector<8x41xbf16>, vector<41x40xbf16>, vector<8x40xf32> -> vector<8x40xf32>
    %c0_52 = arith.constant 0 : index
    %c0_53 = arith.constant 0 : index
    %223 = vector.load %arg5[%c0_52, %c0_53] : memref<1x40xf32, #tpu.memory_space<vmem>>, vector<1x40xf32>
    %224 = vector.broadcast %223 : vector<1x40xf32> to vector<8x40xf32>
    %225 = arith.addf %222, %224 : vector<8x40xf32>
    %cst_54 = arith.constant 2.000000e+00 : f32
    %226 = vector.broadcast %cst_54 : f32 to vector<8x40xf32>
    %227 = arith.mulf %226, %225 : vector<8x40xf32>
    %228 = arith.select %2, %225, %227 : vector<8x40xi1>, vector<8x40xf32>
    %229 = arith.negf %228 : vector<8x40xf32>
    %230 = math.exp %229 : vector<8x40xf32>
    %cst_55 = arith.constant 1.000000e+00 : f32
    %231 = vector.broadcast %cst_55 : f32 to vector<8x40xf32>
    %232 = arith.addf %231, %230 : vector<8x40xf32>
    %233 = arith.divf %231, %232 : vector<8x40xf32>
    %cst_56 = arith.constant 2.000000e+00 : f32
    %234 = vector.broadcast %cst_56 : f32 to vector<8x40xf32>
    %235 = arith.mulf %234, %233 : vector<8x40xf32>
    %cst_57 = arith.constant 1.000000e+00 : f32
    %236 = vector.broadcast %cst_57 : f32 to vector<8x40xf32>
    %237 = arith.subf %235, %236 : vector<8x40xf32>
    %238 = arith.select %2, %233, %237 : vector<8x40xi1>, vector<8x40xf32>
    %239 = vector.extract_strided_slice %238 {offsets = [0, 20], sizes = [8, 10], strides = [1, 1]} : vector<8x40xf32> to vector<8x10xf32>
    %240 = vector.extract_strided_slice %238 {offsets = [0, 0], sizes = [8, 10], strides = [1, 1]} : vector<8x40xf32> to vector<8x10xf32>
    %241 = vector.extract_strided_slice %238 {offsets = [0, 30], sizes = [8, 10], strides = [1, 1]} : vector<8x40xf32> to vector<8x10xf32>
    %242 = arith.mulf %240, %241 : vector<8x10xf32>
    %243 = math.tanh %242 : vector<8x10xf32>
    %244 = arith.mulf %239, %243 : vector<8x10xf32>
    %245 = tpu.concatenate %219, %244 in 1 : vector<8x10xf32>, vector<8x10xf32> -> vector<8x20xf32>
    %c0_58 = arith.constant 0 : index
    %c0_59 = arith.constant 0 : index
    %246 = vector.load %arg6[%c0_58, %c0_59] : memref<20x1xf32, #tpu.memory_space<vmem>>, vector<20x1xf32>
    %cst_60 = arith.constant dense<0.000000e+00> : vector<8x1xf32>
    %247 = tpu.matmul %245, %246, %cst_60 {dimension_numbers = #tpu.dot_dimension_numbers<[1], [0], [0], [1], [0, 0, 1, 1], [], []>} : vector<8x20xf32>, vector<20x1xf32>, vector<8x1xf32> -> vector<8x1xf32>
    %c0_61 = arith.constant 0 : index
    %c0_62 = arith.constant 0 : index
    %248 = vector.load %arg7[%c0_61, %c0_62] : memref<1x1xf32, #tpu.memory_space<vmem>>, vector<1x1xf32>
    %249 = vector.broadcast %248 : vector<1x1xf32> to vector<8x1xf32>
    %250 = arith.addf %247, %249 : vector<8x1xf32>
    %251 = arith.negf %250 : vector<8x1xf32>
    %252 = math.exp %251 : vector<8x1xf32>
    %cst_63 = arith.constant 1.000000e+00 : f32
    %253 = vector.broadcast %cst_63 : f32 to vector<8x1xf32>
    %254 = arith.addf %253, %252 : vector<8x1xf32>
    %255 = arith.divf %253, %254 : vector<8x1xf32>
    %c0_64 = arith.constant 0 : index
    %c0_65 = arith.constant 0 : index
    %256 = vector.load %arg8[%c0_64, %c0_65] : memref<8x1xf32, #tpu.memory_space<vmem>>, vector<8x1xf32>
    tpu.vector_store %arg8[%c0_64, %c0_65], %255 {strides = array<i32>} : memref<8x1xf32, #tpu.memory_space<vmem>>, vector<8x1xf32>,
    return
  }
}

</mosaic_0001>

<llo_original>
// kernel: tpu_custom_call.1
$region0: #{tpu_custom_call.1}
  #allocation0 [shape = 'u32[]', space=smem, size = 0x4, offset = 0x4, fixed_abs, tag = 'smem constant byte address 0x4 - core index']
  #allocation1 [shape = 'u32[144,128]{1,0:T(1,128)}', space=vmem, size = 0x12000, scoped, tag = 'internal scratch']
  #allocation2 [shape = 'f32[1,1]{1,0:T(1,128)S(1)}', space=vmem, size = 0x200, scoped, tag = 'scoped memory for tpu_custom_call.1']
  %s0 = inlined_call_operand.vmem [shape: bf16[64,41], index: 0, kind: input, shape index: {}]
  %s1 = inlined_call_operand.vmem [shape: bf16[41,40], index: 1, kind: input, shape index: {}]
  %s2 = inlined_call_operand.vmem [shape: bf16[10,40], index: 2, kind: input, shape index: {}]
  %s3 = inlined_call_operand.vmem [shape: f32[1,40], index: 3, kind: input, shape index: {}]
  %s4 = inlined_call_operand.vmem [shape: bf16[41,40], index: 4, kind: input, shape index: {}]
  %s5 = inlined_call_operand.vmem [shape: f32[1,40], index: 5, kind: input, shape index: {}]
  %s6 = inlined_call_operand.vmem [shape: f32[20,1], index: 6, kind: input, shape index: {}]
  %s7 = inlined_call_operand.<no memory space> [shape: f32[1,1], index: 7, kind: input, shape index: {}]
  %s8 = inlined_call_operand.vmem [shape: f32[8,1], index: 8, kind: output, shape index: {}]
  %s9 = sld [smem:[#allocation0]]
  $region42: #{tpu_custom_call.1} parent=0
    _
  %s11 = ssub.s32 1, %s9
  %s12 = scalar_select 0, %s11, %s9
  %v13 = vstv %s7
  %14 = vst [vmem:[#allocation2] sm:$0x1] %v13
  // Predicated region
  $region2: #{tpu_custom_call.1} parent=0 // pred_check
    _
  $region3: #{tpu_custom_call.1} parent=0 // pred_check_branch
    %16 = sbr.rel (0) target = $region5
  $region4: #{tpu_custom_call.1} parent=0 // pred_region
    _
  $region5: #{tpu_custom_call.1} parent=0 // pred_fallthru
    _
  // Predicated region
  $region6: #{tpu_custom_call.1} parent=0 // pred_check
    _
  $region7: #{tpu_custom_call.1} parent=0 // pred_check_branch
    %18 = sbr.rel (0) target = $region9
  $region8: #{tpu_custom_call.1} parent=0 // pred_region
    _
  $region9: #{tpu_custom_call.1} parent=0 // pred_fallthru
    _
  // Predicated region
  $region10: #{tpu_custom_call.1} parent=0 // pred_check
    _
  $region11: #{tpu_custom_call.1} parent=0 // pred_check_branch
    %20 = sbr.rel (0) target = $region13
  $region12: #{tpu_custom_call.1} parent=0 // pred_region
    _
  $region13: #{tpu_custom_call.1} parent=0 // pred_fallthru
    _
  // Predicated region
  $region14: #{tpu_custom_call.1} parent=0 // pred_check
    _
  $region15: #{tpu_custom_call.1} parent=0 // pred_check_branch
    %22 = sbr.rel (0) target = $region17
  $region16: #{tpu_custom_call.1} parent=0 // pred_region
    _
  $region17: #{tpu_custom_call.1} parent=0 // pred_fallthru
    _
  // Predicated region
  $region18: #{tpu_custom_call.1} parent=0 // pred_check
    _
  $region19: #{tpu_custom_call.1} parent=0 // pred_check_branch
    %24 = sbr.rel (0) target = $region21
  $region20: #{tpu_custom_call.1} parent=0 // pred_region
    _
  $region21: #{tpu_custom_call.1} parent=0 // pred_fallthru
    _
  // Predicated region
  $region22: #{tpu_custom_call.1} parent=0 // pred_check
    _
  $region23: #{tpu_custom_call.1} parent=0 // pred_check_branch
    %26 = sbr.rel (0) target = $region25
  $region24: #{tpu_custom_call.1} parent=0 // pred_region
    _
  $region25: #{tpu_custom_call.1} parent=0 // pred_fallthru
    _
  // Predicated region
  $region26: #{tpu_custom_call.1} parent=0 // pred_check
    _
  $region27: #{tpu_custom_call.1} parent=0 // pred_check_branch
    %28 = sbr.rel (0) target = $region29
  $region28: #{tpu_custom_call.1} parent=0 // pred_region
    _
  $region29: #{tpu_custom_call.1} parent=0 // pred_fallthru
    _
  // Predicated region
  $region30: #{tpu_custom_call.1} parent=0 // pred_check
    _
  $region31: #{tpu_custom_call.1} parent=0 // pred_check_branch
    %30 = sbr.rel (0) target = $region33
  $region32: #{tpu_custom_call.1} parent=0 // pred_region
    _
  $region33: #{tpu_custom_call.1} parent=0 // pred_fallthru
    _
  %v32 = vlaneseq
  %v33 = vand.u32 %v32, 127
  %vm34 = vcmp.lt.s32.totalorder %v33, 30
  %v35 = vld [vmem:[%s0] sm:$0xf]
  %v36 = vld [vmem:[%s0 + $0x4] sm:$0xf]
  %v37 = vld [vmem:[%s0 + $0x8] sm:$0xf]
  %v38 = vld [vmem:[%s0 + $0xc] sm:$0xf]
  %v39 = vld [vmem:[%s0 + $0x10] sm:$0xf]
  %v40 = vld [vmem:[%s0 + $0x14] sm:$0xf]
  %v41 = vld [vmem:[%s0 + $0x18] sm:$0xf]
  %v42 = vld [vmem:[%s0 + $0x1c] sm:$0xf]
  %v43 = vld [vmem:[%s2] sm:$0xf]
  %v44 = vld [vmem:[%s2 + $0x4] sm:$0x1]
  %v45 = vld [vmem:[%s1] sm:$0xf]
  %v46 = vld [vmem:[%s1 + $0x4] sm:$0xf]
  %v47 = vld [vmem:[%s1 + $0x8] sm:$0xf]
  %v48 = vld [vmem:[%s1 + $0xc] sm:$0xf]
  %v49 = vld [vmem:[%s1 + $0x10] sm:$0xf]
  %v50 = vld [vmem:[%s1 + $0x14] sm:$0x1]
  %v51 = vld [vmem:[%s3] sm:$0x1]
  %v53 = vlaneseq
  %v54 = vshrl.u32 %v53, 7
  %v55 = vsub.s32 0, %v54
  %v56 = vrot.slane %v51, %v55
  %v66 = vunpack.c.l.b16 %v35
  %v67 = vunpack.c.l.b16 %v36
  %v68 = vunpack.c.l.b16 %v37
  %v69 = vunpack.c.l.b16 %v38
  %v70 = vunpack.c.l.b16 %v39
  %v71 = vunpack.c.l.b16 %v40
  %v72 = vunpack.c.l.b16 %v41
  %v73 = vunpack.c.l.b16 %v42
  %v74 = vpack.c.b16 %v67, %v66
  %v75 = vpack.c.b16 %v69, %v68
  %v76 = vpack.c.b16 %v71, %v70
  %v77 = vpack.c.b16 %v73, %v72
  %v84 = vunpack.c.l.b16 %v45
  %v85 = vunpack.c.l.b16 %v46
  %v86 = vunpack.c.l.b16 %v47
  %v87 = vunpack.c.l.b16 %v48
  %v88 = vunpack.c.l.b16 %v49
  %v89 = vunpack.c.l.b16 %v50
  %v90 = vpack.c.b16 %v85, %v84
  %v91 = vpack.c.b16 %v87, %v86
  %v92 = vpack.c.b16 %v89, %v88
  %vm95 = vcmask 334848
  %v97 = vsel %vm95, %v74, 0
  %v100 = vsel %vm95, %v75, 0
  %v103 = vsel %vm95, %v76, 0
  %v106 = vsel %vm95, %v77, 0
  %vm108 = vcmask 1043456
  %vm109 = vcmask 1044480
  %v110 = vsel %vm108, 4294967295, 65535
  %v111 = vsel %vm109, %v110, 0
  %v113 = vand.u32 %v92, %v111
  %115 = vmatprep.subr.bf16.mxu0 0
  %116 = vmatpush1.bf16.msra.mxu0 %v90
  %117 = vmatprep.subr.bf16.mxu0 0
  %118 = vmatpush1.bf16.msra.mxu0 %v91
  %119 = vmatprep.subr.bf16.mxu0 0
  %120 = vmatpush1.bf16.msra.mxu0 %v113
  %121 = vmatprep.subr.bf16.mxu0 0
  %122 = vmatpush1.bf16.msra.mxu0 0
  %123 = vmatprep.subr.bf16.mxu0 0
  %124 = vmatpush1.bf16.msra.mxu0 0
  %125 = vmatprep.subr.bf16.mxu0 0
  %126 = vmatpush1.bf16.msra.mxu0 0
  %127 = vmatprep.subr.bf16.mxu0 0
  %128 = vmatpush1.bf16.msra.mxu0 0
  %129 = vmatprep.subr.bf16.mxu0 0
  %130 = vmatpush1.bf16.msra.mxu0 0
  %131 = vmatprep.subr.bf16.mxu0 0
  %132 = vmatpush1.bf16.msra.mxu0 0
  %133 = vmatprep.subr.bf16.mxu0 0
  %134 = vmatpush1.bf16.msra.mxu0 0
  %135 = vmatprep.subr.bf16.mxu0 0
  %136 = vmatpush1.bf16.msra.mxu0 0
  %137 = vmatprep.subr.bf16.mxu0 0
  %138 = vmatpush1.bf16.msra.mxu0 0
  %139 = vmatprep.subr.bf16.mxu0 0
  %140 = vmatpush1.bf16.msra.mxu0 0
  %141 = vmatprep.subr.bf16.mxu0 0
  %142 = vmatpush1.bf16.msra.mxu0 0
  %143 = vmatprep.subr.bf16.mxu0 0
  %144 = vmatpush1.bf16.msra.mxu0 0
  %145 = vmatprep.subr.bf16.mxu0 0
  %146 = vmatpush1.bf16.msra.mxu0 0
  %147 = vmatprep.mubr.bf16.mxu0 0
  %148 = vmatmul.mubr.bf16.gmra.mrb[0].mxu0 %v97
  %v149 = vpop.f32.mrb[0].mxu0
  %v150 = vadd.f32 %v56, %v149
  %v151 = vpop.f32.mrb[0].mxu0
  %v152 = vpop.f32.mrb[0].mxu0
  %v153 = vadd.f32 %v56, %v152
  %v154 = vpop.f32.mrb[0].mxu0
  %155 = vmatprep.mubr.bf16.mxu0 0
  %156 = vmatmul.mubr.bf16.gmra.mrb[0].mxu0 %v100
  %v157 = vpop.f32.mrb[0].mxu0
  %v158 = vadd.f32 %v56, %v157
  %v159 = vpop.f32.mrb[0].mxu0
  %v160 = vpop.f32.mrb[0].mxu0
  %v161 = vadd.f32 %v56, %v160
  %v162 = vpop.f32.mrb[0].mxu0
  %163 = vmatprep.mubr.bf16.mxu0 0
  %164 = vmatmul.mubr.bf16.gmra.mrb[0].mxu0 %v103
  %v165 = vpop.f32.mrb[0].mxu0
  %v166 = vadd.f32 %v56, %v165
  %v167 = vpop.f32.mrb[0].mxu0
  %v168 = vpop.f32.mrb[0].mxu0
  %v169 = vadd.f32 %v56, %v168
  %v170 = vpop.f32.mrb[0].mxu0
  %171 = vmatprep.mubr.bf16.mxu0 0
  %172 = vmatmul.mubr.bf16.gmra.mrb[0].mxu0 %v106
  %v173 = vpop.f32.mrb[0].mxu0
  %v174 = vadd.f32 %v56, %v173
  %v175 = vpop.f32.mrb[0].mxu0
  %v176 = vpop.f32.mrb[0].mxu0
  %v177 = vadd.f32 %v56, %v176
  %v178 = vpop.f32.mrb[0].mxu0
  %179 = vdwg.mxu0
  %v182 = vunpack.c.l.b16 %v43
  %v183 = vunpack.c.l.b16 %v44
  %v184 = vpack.c.b16 %v183, %v182
  %vm185 = vcmask 80896
  %v187 = vsel %vm185, 0, 0
  %v190 = vsel %vm109, %v184, 0
  %192 = vmatprep.subr.bf16.mxu0 0
  %193 = vmatpush1.bf16.msra.mxu0 %v190
  %194 = vmatprep.subr.bf16.mxu0 0
  %195 = vmatpush1.bf16.msra.mxu0 0
  %196 = vmatprep.subr.bf16.mxu0 0
  %197 = vmatpush1.bf16.msra.mxu0 0
  %198 = vmatprep.subr.bf16.mxu0 0
  %199 = vmatpush1.bf16.msra.mxu0 0
  %200 = vmatprep.subr.bf16.mxu0 0
  %201 = vmatpush1.bf16.msra.mxu0 0
  %202 = vmatprep.subr.bf16.mxu0 0
  %203 = vmatpush1.bf16.msra.mxu0 0
  %204 = vmatprep.subr.bf16.mxu0 0
  %205 = vmatpush1.bf16.msra.mxu0 0
  %206 = vmatprep.subr.bf16.mxu0 0
  %207 = vmatpush1.bf16.msra.mxu0 0
  %208 = vmatprep.subr.bf16.mxu0 0
  %209 = vmatpush1.bf16.msra.mxu0 0
  %210 = vmatprep.subr.bf16.mxu0 0
  %211 = vmatpush1.bf16.msra.mxu0 0
  %212 = vmatprep.subr.bf16.mxu0 0
  %213 = vmatpush1.bf16.msra.mxu0 0
  %214 = vmatprep.subr.bf16.mxu0 0
  %215 = vmatpush1.bf16.msra.mxu0 0
  %216 = vmatprep.subr.bf16.mxu0 0
  %217 = vmatpush1.bf16.msra.mxu0 0
  %218 = vmatprep.subr.bf16.mxu0 0
  %219 = vmatpush1.bf16.msra.mxu0 0
  %220 = vmatprep.subr.bf16.mxu0 0
  %221 = vmatpush1.bf16.msra.mxu0 0
  %222 = vmatprep.subr.bf16.mxu0 0
  %223 = vmatpush1.bf16.msra.mxu0 0
  %224 = vmatprep.mubr.bf16.mxu0 0
  %225 = vmatmul.mubr.bf16.gmra.mrb[0].mxu0 %v187
  %v226 = vpop.f32.mrb[0].mxu0
  %v227 = vadd.f32 0.0, %v226
  %v228 = vpop.f32.mrb[0].mxu0
  %v229 = vpop.f32.mrb[0].mxu0
  %v230 = vpop.f32.mrb[0].mxu0
  %231 = vdwg.mxu0
  %v232 = vadd.f32 %v150, %v227
  %v233 = vmul.f32 %v232, 2.0
  %v234 = vsel %vm34, %v232, %v233
  %v235 = vxor.u32 %v234, 2147483648
  %v236 = vmul.f32 %v235, 1.442695
  %v237 = vpow.pop %v236
  %v238 = vadd.f32 %v237, 1.0
  %v239 = vrcp.pop %v238
  %v240 = vmul.f32 1.0, %v239
  %v241 = vmul.f32 %v240, 2.0
  %v242 = vsub.f32 %v241, 1.0
  %v243 = vsel %vm34, %v240, %v242
  %v244 = vmul.f32 %v243, 0.0
  %246 = vrot.lane.b32.xlu0 %v243, 98
  %v247 = vpop.permute.xlu0 %246
  %v249 = vmul.f32 %v243, %v247
  %251 = vrot.lane.b32.xlu0 %v249, 10
  %v252 = vpop.permute.xlu0 %251
  %v254 = vadd.f32 %v244, %v252
  %v255 = vtanh.pop %v254
  %257 = vrot.lane.b32.xlu0 %v255, 10
  %v258 = vpop.permute.xlu0 %257
  %v260 = vmul.f32 %v243, %v258
  %v261 = vpack.c.bf16 %v260, %v260
  %263 = vrot.lane.b32.xlu0 %v261, 108
  %v264 = vpop.permute.xlu0 %263
  %v266 = vsel %vm185, %v264, 0
  %268 = vmatprep.subr.bf16.mxu0 0
  %269 = vmatpush1.bf16.msra.mxu0 %v190
  %270 = vmatprep.subr.bf16.mxu0 0
  %271 = vmatpush1.bf16.msra.mxu0 0
  %272 = vmatprep.subr.bf16.mxu0 0
  %273 = vmatpush1.bf16.msra.mxu0 0
  %274 = vmatprep.subr.bf16.mxu0 0
  %275 = vmatpush1.bf16.msra.mxu0 0
  %276 = vmatprep.subr.bf16.mxu0 0
  %277 = vmatpush1.bf16.msra.mxu0 0
  %278 = vmatprep.subr.bf16.mxu0 0
  %279 = vmatpush1.bf16.msra.mxu0 0
  %280 = vmatprep.subr.bf16.mxu0 0
  %281 = vmatpush1.bf16.msra.mxu0 0
  %282 = vmatprep.subr.bf16.mxu0 0
  %283 = vmatpush1.bf16.msra.mxu0 0
  %284 = vmatprep.subr.bf16.mxu0 0
  %285 = vmatpush1.bf16.msra.mxu0 0
  %286 = vmatprep.subr.bf16.mxu0 0
  %287 = vmatpush1.bf16.msra.mxu0 0
  %288 = vmatprep.subr.bf16.mxu0 0
  %289 = vmatpush1.bf16.msra.mxu0 0
  %290 = vmatprep.subr.bf16.mxu0 0
  %291 = vmatpush1.bf16.msra.mxu0 0
  %292 = vmatprep.subr.bf16.mxu0 0
  %293 = vmatpush1.bf16.msra.mxu0 0
  %294 = vmatprep.subr.bf16.mxu0 0
  %295 = vmatpush1.bf16.msra.mxu0 0
  %296 = vmatprep.subr.bf16.mxu0 0
  %297 = vmatpush1.bf16.msra.mxu0 0
  %298 = vmatprep.subr.bf16.mxu0 0
  %299 = vmatpush1.bf16.msra.mxu0 0
  %300 = vmatprep.mubr.bf16.mxu0 0
  %301 = vmatmul.mubr.bf16.gmra.mrb[0].mxu0 %v266
  %v302 = vpop.f32.mrb[0].mxu0
  %v303 = vadd.f32 0.0, %v302
  %v304 = vpop.f32.mrb[0].mxu0
  %v305 = vpop.f32.mrb[0].mxu0
  %v306 = vpop.f32.mrb[0].mxu0
  %307 = vdwg.mxu0
  %v308 = vadd.f32 %v153, %v303
  %v309 = vmul.f32 %v308, 2.0
  %v310 = vsel %vm34, %v308, %v309
  %v311 = vxor.u32 %v310, 2147483648
  %v312 = vmul.f32 %v311, 1.442695
  %v313 = vpow.pop %v312
  %v314 = vadd.f32 %v313, 1.0
  %v315 = vrcp.pop %v314
  %v316 = vmul.f32 1.0, %v315
  %v317 = vmul.f32 %v316, 2.0
  %v318 = vsub.f32 %v317, 1.0
  %v319 = vsel %vm34, %v316, %v318
  %v320 = vmul.f32 %v319, %v254
  %322 = vrot.lane.b32.xlu0 %v319, 98
  %v323 = vpop.permute.xlu0 %322
  %v325 = vmul.f32 %v319, %v323
  %327 = vrot.lane.b32.xlu0 %v325, 10
  %v328 = vpop.permute.xlu0 %327
  %v330 = vadd.f32 %v320, %v328
  %v331 = vtanh.pop %v330
  %333 = vrot.lane.b32.xlu0 %v331, 10
  %v334 = vpop.permute.xlu0 %333
  %v336 = vmul.f32 %v319, %v334
  %v337 = vpack.c.bf16 %v336, %v336
  %339 = vrot.lane.b32.xlu0 %v337, 108
  %v340 = vpop.permute.xlu0 %339
  %v342 = vsel %vm185, %v340, 0
  %344 = vmatprep.subr.bf16.mxu0 0
  %345 = vmatpush1.bf16.msra.mxu0 %v190
  %346 = vmatprep.subr.bf16.mxu0 0
  %347 = vmatpush1.bf16.msra.mxu0 0
  %348 = vmatprep.subr.bf16.mxu0 0
  %349 = vmatpush1.bf16.msra.mxu0 0
  %350 = vmatprep.subr.bf16.mxu0 0
  %351 = vmatpush1.bf16.msra.mxu0 0
  %352 = vmatprep.subr.bf16.mxu0 0
  %353 = vmatpush1.bf16.msra.mxu0 0
  %354 = vmatprep.subr.bf16.mxu0 0
  %355 = vmatpush1.bf16.msra.mxu0 0
  %356 = vmatprep.subr.bf16.mxu0 0
  %357 = vmatpush1.bf16.msra.mxu0 0
  %358 = vmatprep.subr.bf16.mxu0 0
  %359 = vmatpush1.bf16.msra.mxu0 0
  %360 = vmatprep.subr.bf16.mxu0 0
  %361 = vmatpush1.bf16.msra.mxu0 0
  %362 = vmatprep.subr.bf16.mxu0 0
  %363 = vmatpush1.bf16.msra.mxu0 0
  %364 = vmatprep.subr.bf16.mxu0 0
  %365 = vmatpush1.bf16.msra.mxu0 0
  %366 = vmatprep.subr.bf16.mxu0 0
  %367 = vmatpush1.bf16.msra.mxu0 0
  %368 = vmatprep.subr.bf16.mxu0 0
  %369 = vmatpush1.bf16.msra.mxu0 0
  %370 = vmatprep.subr.bf16.mxu0 0
  %371 = vmatpush1.bf16.msra.mxu0 0
  %372 = vmatprep.subr.bf16.mxu0 0
  %373 = vmatpush1.bf16.msra.mxu0 0
  %374 = vmatprep.subr.bf16.mxu0 0
  %375 = vmatpush1.bf16.msra.mxu0 0
  %376 = vmatprep.mubr.bf16.mxu0 0
  %377 = vmatmul.mubr.bf16.gmra.mrb[0].mxu0 %v342
  %v378 = vpop.f32.mrb[0].mxu0
  %v379 = vadd.f32 0.0, %v378
  %v380 = vpop.f32.mrb[0].mxu0
  %v381 = vpop.f32.mrb[0].mxu0
  %v382 = vpop.f32.mrb[0].mxu0
  %383 = vdwg.mxu0
  %v384 = vadd.f32 %v158, %v379
  %v385 = vmul.f32 %v384, 2.0
  %v386 = vsel %vm34, %v384, %v385
  %v387 = vxor.u32 %v386, 2147483648
  %v388 = vmul.f32 %v387, 1.442695
  %v389 = vpow.pop %v388
  %v390 = vadd.f32 %v389, 1.0
  %v391 = vrcp.pop %v390
  %v392 = vmul.f32 1.0, %v391
  %v393 = vmul.f32 %v392, 2.0
  %v394 = vsub.f32 %v393, 1.0
  %v395 = vsel %vm34, %v392, %v394
  %v396 = vmul.f32 %v395, %v330
  %398 = vrot.lane.b32.xlu0 %v395, 98
  %v399 = vpop.permute.xlu0 %398
  %v401 = vmul.f32 %v395, %v399
  %403 = vrot.lane.b32.xlu0 %v401, 10
  %v404 = vpop.permute.xlu0 %403
  %v406 = vadd.f32 %v396, %v404
  %v407 = vtanh.pop %v406
  %409 = vrot.lane.b32.xlu0 %v407, 10
  %v410 = vpop.permute.xlu0 %409
  %v412 = vmul.f32 %v395, %v410
  %v413 = vpack.c.bf16 %v412, %v412
  %415 = vrot.lane.b32.xlu0 %v413, 108
  %v416 = vpop.permute.xlu0 %415
  %v418 = vsel %vm185, %v416, 0
  %420 = vmatprep.subr.bf16.mxu0 0
  %421 = vmatpush1.bf16.msra.mxu0 %v190
  %422 = vmatprep.subr.bf16.mxu0 0
  %423 = vmatpush1.bf16.msra.mxu0 0
  %424 = vmatprep.subr.bf16.mxu0 0
  %425 = vmatpush1.bf16.msra.mxu0 0
  %426 = vmatprep.subr.bf16.mxu0 0
  %427 = vmatpush1.bf16.msra.mxu0 0
  %428 = vmatprep.subr.bf16.mxu0 0
  %429 = vmatpush1.bf16.msra.mxu0 0
  %430 = vmatprep.subr.bf16.mxu0 0
  %431 = vmatpush1.bf16.msra.mxu0 0
  %432 = vmatprep.subr.bf16.mxu0 0
  %433 = vmatpush1.bf16.msra.mxu0 0
  %434 = vmatprep.subr.bf16.mxu0 0
  %435 = vmatpush1.bf16.msra.mxu0 0
  %436 = vmatprep.subr.bf16.mxu0 0
  %437 = vmatpush1.bf16.msra.mxu0 0
  %438 = vmatprep.subr.bf16.mxu0 0
  %439 = vmatpush1.bf16.msra.mxu0 0
  %440 = vmatprep.subr.bf16.mxu0 0
  %441 = vmatpush1.bf16.msra.mxu0 0
  %442 = vmatprep.subr.bf16.mxu0 0
  %443 = vmatpush1.bf16.msra.mxu0 0
  %444 = vmatprep.subr.bf16.mxu0 0
  %445 = vmatpush1.bf16.msra.mxu0 0
  %446 = vmatprep.subr.bf16.mxu0 0
  %447 = vmatpush1.bf16.msra.mxu0 0
  %448 = vmatprep.subr.bf16.mxu0 0
  %449 = vmatpush1.bf16.msra.mxu0 0
  %450 = vmatprep.subr.bf16.mxu0 0
  %451 = vmatpush1.bf16.msra.mxu0 0
  %452 = vmatprep.mubr.bf16.mxu0 0
  %453 = vmatmul.mubr.bf16.gmra.mrb[0].mxu0 %v418
  %v454 = vpop.f32.mrb[0].mxu0
  %v455 = vadd.f32 0.0, %v454
  %v456 = vpop.f32.mrb[0].mxu0
  %v457 = vpop.f32.mrb[0].mxu0
  %v458 = vpop.f32.mrb[0].mxu0
  %459 = vdwg.mxu0
  %v460 = vadd.f32 %v161, %v455
  %v461 = vmul.f32 %v460, 2.0
  %v462 = vsel %vm34, %v460, %v461
  %v463 = vxor.u32 %v462, 2147483648
  %v464 = vmul.f32 %v463, 1.442695
  %v465 = vpow.pop %v464
  %v466 = vadd.f32 %v465, 1.0
  %v467 = vrcp.pop %v466
  %v468 = vmul.f32 1.0, %v467
  %v469 = vmul.f32 %v468, 2.0
  %v470 = vsub.f32 %v469, 1.0
  %v471 = vsel %vm34, %v468, %v470
  %v472 = vmul.f32 %v471, %v406
  %474 = vrot.lane.b32.xlu0 %v471, 98
  %v475 = vpop.permute.xlu0 %474
  %v477 = vmul.f32 %v471, %v475
  %479 = vrot.lane.b32.xlu0 %v477, 10
  %v480 = vpop.permute.xlu0 %479
  %v482 = vadd.f32 %v472, %v480
  %v483 = vtanh.pop %v482
  %485 = vrot.lane.b32.xlu0 %v483, 10
  %v486 = vpop.permute.xlu0 %485
  %v488 = vmul.f32 %v471, %v486
  %v489 = vpack.c.bf16 %v488, %v488
  %491 = vrot.lane.b32.xlu0 %v489, 108
  %v492 = vpop.permute.xlu0 %491
  %v494 = vsel %vm185, %v492, 0
  %496 = vmatprep.subr.bf16.mxu0 0
  %497 = vmatpush1.bf16.msra.mxu0 %v190
  %498 = vmatprep.subr.bf16.mxu0 0
  %499 = vmatpush1.bf16.msra.mxu0 0
  %500 = vmatprep.subr.bf16.mxu0 0
  %501 = vmatpush1.bf16.msra.mxu0 0
  %502 = vmatprep.subr.bf16.mxu0 0
  %503 = vmatpush1.bf16.msra.mxu0 0
  %504 = vmatprep.subr.bf16.mxu0 0
  %505 = vmatpush1.bf16.msra.mxu0 0
  %506 = vmatprep.subr.bf16.mxu0 0
  %507 = vmatpush1.bf16.msra.mxu0 0
  %508 = vmatprep.subr.bf16.mxu0 0
  %509 = vmatpush1.bf16.msra.mxu0 0
  %510 = vmatprep.subr.bf16.mxu0 0
  %511 = vmatpush1.bf16.msra.mxu0 0
  %512 = vmatprep.subr.bf16.mxu0 0
  %513 = vmatpush1.bf16.msra.mxu0 0
  %514 = vmatprep.subr.bf16.mxu0 0
  %515 = vmatpush1.bf16.msra.mxu0 0
  %516 = vmatprep.subr.bf16.mxu0 0
  %517 = vmatpush1.bf16.msra.mxu0 0
  %518 = vmatprep.subr.bf16.mxu0 0
  %519 = vmatpush1.bf16.msra.mxu0 0
  %520 = vmatprep.subr.bf16.mxu0 0
  %521 = vmatpush1.bf16.msra.mxu0 0
  %522 = vmatprep.subr.bf16.mxu0 0
  %523 = vmatpush1.bf16.msra.mxu0 0
  %524 = vmatprep.subr.bf16.mxu0 0
  %525 = vmatpush1.bf16.msra.mxu0 0
  %526 = vmatprep.subr.bf16.mxu0 0
  %527 = vmatpush1.bf16.msra.mxu0 0
  %528 = vmatprep.mubr.bf16.mxu0 0
  %529 = vmatmul.mubr.bf16.gmra.mrb[0].mxu0 %v494
  %v530 = vpop.f32.mrb[0].mxu0
  %v531 = vadd.f32 0.0, %v530
  %v532 = vpop.f32.mrb[0].mxu0
  %v533 = vpop.f32.mrb[0].mxu0
  %v534 = vpop.f32.mrb[0].mxu0
  %535 = vdwg.mxu0
  %v536 = vadd.f32 %v166, %v531
  %v537 = vmul.f32 %v536, 2.0
  %v538 = vsel %vm34, %v536, %v537
  %v539 = vxor.u32 %v538, 2147483648
  %v540 = vmul.f32 %v539, 1.442695
  %v541 = vpow.pop %v540
  %v542 = vadd.f32 %v541, 1.0
  %v543 = vrcp.pop %v542
  %v544 = vmul.f32 1.0, %v543
  %v545 = vmul.f32 %v544, 2.0
  %v546 = vsub.f32 %v545, 1.0
  %v547 = vsel %vm34, %v544, %v546
  %v548 = vmul.f32 %v547, %v482
  %550 = vrot.lane.b32.xlu0 %v547, 98
  %v551 = vpop.permute.xlu0 %550
  %v553 = vmul.f32 %v547, %v551
  %555 = vrot.lane.b32.xlu0 %v553, 10
  %v556 = vpop.permute.xlu0 %555
  %v558 = vadd.f32 %v548, %v556
  %v559 = vtanh.pop %v558
  %561 = vrot.lane.b32.xlu0 %v559, 10
  %v562 = vpop.permute.xlu0 %561
  %v564 = vmul.f32 %v547, %v562
  %v565 = vpack.c.bf16 %v564, %v564
  %567 = vrot.lane.b32.xlu0 %v565, 108
  %v568 = vpop.permute.xlu0 %567
  %v570 = vsel %vm185, %v568, 0
  %572 = vmatprep.subr.bf16.mxu0 0
  %573 = vmatpush1.bf16.msra.mxu0 %v190
  %574 = vmatprep.subr.bf16.mxu0 0
  %575 = vmatpush1.bf16.msra.mxu0 0
  %576 = vmatprep.subr.bf16.mxu0 0
  %577 = vmatpush1.bf16.msra.mxu0 0
  %578 = vmatprep.subr.bf16.mxu0 0
  %579 = vmatpush1.bf16.msra.mxu0 0
  %580 = vmatprep.subr.bf16.mxu0 0
  %581 = vmatpush1.bf16.msra.mxu0 0
  %582 = vmatprep.subr.bf16.mxu0 0
  %583 = vmatpush1.bf16.msra.mxu0 0
  %584 = vmatprep.subr.bf16.mxu0 0
  %585 = vmatpush1.bf16.msra.mxu0 0
  %586 = vmatprep.subr.bf16.mxu0 0
  %587 = vmatpush1.bf16.msra.mxu0 0
  %588 = vmatprep.subr.bf16.mxu0 0
  %589 = vmatpush1.bf16.msra.mxu0 0
  %590 = vmatprep.subr.bf16.mxu0 0
  %591 = vmatpush1.bf16.msra.mxu0 0
  %592 = vmatprep.subr.bf16.mxu0 0
  %593 = vmatpush1.bf16.msra.mxu0 0
  %594 = vmatprep.subr.bf16.mxu0 0
  %595 = vmatpush1.bf16.msra.mxu0 0
  %596 = vmatprep.subr.bf16.mxu0 0
  %597 = vmatpush1.bf16.msra.mxu0 0
  %598 = vmatprep.subr.bf16.mxu0 0
  %599 = vmatpush1.bf16.msra.mxu0 0
  %600 = vmatprep.subr.bf16.mxu0 0
  %601 = vmatpush1.bf16.msra.mxu0 0
  %602 = vmatprep.subr.bf16.mxu0 0
  %603 = vmatpush1.bf16.msra.mxu0 0
  %604 = vmatprep.mubr.bf16.mxu0 0
  %605 = vmatmul.mubr.bf16.gmra.mrb[0].mxu0 %v570
  %v606 = vpop.f32.mrb[0].mxu0
  %v607 = vadd.f32 0.0, %v606
  %v608 = vpop.f32.mrb[0].mxu0
  %v609 = vpop.f32.mrb[0].mxu0
  %v610 = vpop.f32.mrb[0].mxu0
  %611 = vdwg.mxu0
  %v612 = vadd.f32 %v169, %v607
  %v613 = vmul.f32 %v612, 2.0
  %v614 = vsel %vm34, %v612, %v613
  %v615 = vxor.u32 %v614, 2147483648
  %v616 = vmul.f32 %v615, 1.442695
  %v617 = vpow.pop %v616
  %v618 = vadd.f32 %v617, 1.0
  %v619 = vrcp.pop %v618
  %v620 = vmul.f32 1.0, %v619
  %v621 = vmul.f32 %v620, 2.0
  %v622 = vsub.f32 %v621, 1.0
  %v623 = vsel %vm34, %v620, %v622
  %v624 = vmul.f32 %v623, %v558
  %626 = vrot.lane.b32.xlu0 %v623, 98
  %v627 = vpop.permute.xlu0 %626
  %v629 = vmul.f32 %v623, %v627
  %631 = vrot.lane.b32.xlu0 %v629, 10
  %v632 = vpop.permute.xlu0 %631
  %v634 = vadd.f32 %v624, %v632
  %v635 = vtanh.pop %v634
  %637 = vrot.lane.b32.xlu0 %v635, 10
  %v638 = vpop.permute.xlu0 %637
  %v640 = vmul.f32 %v623, %v638
  %v641 = vpack.c.bf16 %v640, %v640
  %643 = vrot.lane.b32.xlu0 %v641, 108
  %v644 = vpop.permute.xlu0 %643
  %v646 = vsel %vm185, %v644, 0
  %648 = vmatprep.subr.bf16.mxu0 0
  %649 = vmatpush1.bf16.msra.mxu0 %v190
  %650 = vmatprep.subr.bf16.mxu0 0
  %651 = vmatpush1.bf16.msra.mxu0 0
  %652 = vmatprep.subr.bf16.mxu0 0
  %653 = vmatpush1.bf16.msra.mxu0 0
  %654 = vmatprep.subr.bf16.mxu0 0
  %655 = vmatpush1.bf16.msra.mxu0 0
  %656 = vmatprep.subr.bf16.mxu0 0
  %657 = vmatpush1.bf16.msra.mxu0 0
  %658 = vmatprep.subr.bf16.mxu0 0
  %659 = vmatpush1.bf16.msra.mxu0 0
  %660 = vmatprep.subr.bf16.mxu0 0
  %661 = vmatpush1.bf16.msra.mxu0 0
  %662 = vmatprep.subr.bf16.mxu0 0
  %663 = vmatpush1.bf16.msra.mxu0 0
  %664 = vmatprep.subr.bf16.mxu0 0
  %665 = vmatpush1.bf16.msra.mxu0 0
  %666 = vmatprep.subr.bf16.mxu0 0
  %667 = vmatpush1.bf16.msra.mxu0 0
  %668 = vmatprep.subr.bf16.mxu0 0
  %669 = vmatpush1.bf16.msra.mxu0 0
  %670 = vmatprep.subr.bf16.mxu0 0
  %671 = vmatpush1.bf16.msra.mxu0 0
  %672 = vmatprep.subr.bf16.mxu0 0
  %673 = vmatpush1.bf16.msra.mxu0 0
  %674 = vmatprep.subr.bf16.mxu0 0
  %675 = vmatpush1.bf16.msra.mxu0 0
  %676 = vmatprep.subr.bf16.mxu0 0
  %677 = vmatpush1.bf16.msra.mxu0 0
  %678 = vmatprep.subr.bf16.mxu0 0
  %679 = vmatpush1.bf16.msra.mxu0 0
  %680 = vmatprep.mubr.bf16.mxu0 0
  %681 = vmatmul.mubr.bf16.gmra.mrb[0].mxu0 %v646
  %v682 = vpop.f32.mrb[0].mxu0
  %v683 = vadd.f32 0.0, %v682
  %v684 = vpop.f32.mrb[0].mxu0
  %v685 = vpop.f32.mrb[0].mxu0
  %v686 = vpop.f32.mrb[0].mxu0
  %687 = vdwg.mxu0
  %v688 = vadd.f32 %v174, %v683
  %v689 = vmul.f32 %v688, 2.0
  %v690 = vsel %vm34, %v688, %v689
  %v691 = vxor.u32 %v690, 2147483648
  %v692 = vmul.f32 %v691, 1.442695
  %v693 = vpow.pop %v692
  %v694 = vadd.f32 %v693, 1.0
  %v695 = vrcp.pop %v694
  %v696 = vmul.f32 1.0, %v695
  %v697 = vmul.f32 %v696, 2.0
  %v698 = vsub.f32 %v697, 1.0
  %v699 = vsel %vm34, %v696, %v698
  %v700 = vmul.f32 %v699, %v634
  %702 = vrot.lane.b32.xlu0 %v699, 98
  %v703 = vpop.permute.xlu0 %702
  %v705 = vmul.f32 %v699, %v703
  %707 = vrot.lane.b32.xlu0 %v705, 10
  %v708 = vpop.permute.xlu0 %707
  %v710 = vadd.f32 %v700, %v708
  %v711 = vtanh.pop %v710
  %713 = vrot.lane.b32.xlu0 %v711, 10
  %v714 = vpop.permute.xlu0 %713
  %v716 = vmul.f32 %v699, %v714
  %v717 = vpack.c.bf16 %v716, %v716
  %719 = vrot.lane.b32.xlu0 %v717, 108
  %v720 = vpop.permute.xlu0 %719
  %v722 = vsel %vm185, %v720, 0
  %724 = vmatprep.subr.bf16.mxu0 0
  %725 = vmatpush1.bf16.msra.mxu0 %v190
  %726 = vmatprep.subr.bf16.mxu0 0
  %727 = vmatpush1.bf16.msra.mxu0 0
  %728 = vmatprep.subr.bf16.mxu0 0
  %729 = vmatpush1.bf16.msra.mxu0 0
  %730 = vmatprep.subr.bf16.mxu0 0
  %731 = vmatpush1.bf16.msra.mxu0 0
  %732 = vmatprep.subr.bf16.mxu0 0
  %733 = vmatpush1.bf16.msra.mxu0 0
  %734 = vmatprep.subr.bf16.mxu0 0
  %735 = vmatpush1.bf16.msra.mxu0 0
  %736 = vmatprep.subr.bf16.mxu0 0
  %737 = vmatpush1.bf16.msra.mxu0 0
  %738 = vmatprep.subr.bf16.mxu0 0
  %739 = vmatpush1.bf16.msra.mxu0 0
  %740 = vmatprep.subr.bf16.mxu0 0
  %741 = vmatpush1.bf16.msra.mxu0 0
  %742 = vmatprep.subr.bf16.mxu0 0
  %743 = vmatpush1.bf16.msra.mxu0 0
  %744 = vmatprep.subr.bf16.mxu0 0
  %745 = vmatpush1.bf16.msra.mxu0 0
  %746 = vmatprep.subr.bf16.mxu0 0
  %747 = vmatpush1.bf16.msra.mxu0 0
  %748 = vmatprep.subr.bf16.mxu0 0
  %749 = vmatpush1.bf16.msra.mxu0 0
  %750 = vmatprep.subr.bf16.mxu0 0
  %751 = vmatpush1.bf16.msra.mxu0 0
  %752 = vmatprep.subr.bf16.mxu0 0
  %753 = vmatpush1.bf16.msra.mxu0 0
  %754 = vmatprep.subr.bf16.mxu0 0
  %755 = vmatpush1.bf16.msra.mxu0 0
  %756 = vmatprep.mubr.bf16.mxu0 0
  %757 = vmatmul.mubr.bf16.gmra.mrb[0].mxu0 %v722
  %v758 = vpop.f32.mrb[0].mxu0
  %v759 = vadd.f32 0.0, %v758
  %v760 = vpop.f32.mrb[0].mxu0
  %v761 = vpop.f32.mrb[0].mxu0
  %v762 = vpop.f32.mrb[0].mxu0
  %763 = vdwg.mxu0
  %v764 = vadd.f32 %v177, %v759
  %v765 = vmul.f32 %v764, 2.0
  %v766 = vsel %vm34, %v764, %v765
  %v767 = vxor.u32 %v766, 2147483648
  %v768 = vmul.f32 %v767, 1.442695
  %v769 = vpow.pop %v768
  %v770 = vadd.f32 %v769, 1.0
  %v771 = vrcp.pop %v770
  %v772 = vmul.f32 1.0, %v771
  %v773 = vmul.f32 %v772, 2.0
  %v774 = vsub.f32 %v773, 1.0
  %v775 = vsel %vm34, %v772, %v774
  %v776 = vmul.f32 %v775, %v710
  %778 = vrot.lane.b32.xlu0 %v775, 98
  %v779 = vpop.permute.xlu0 %778
  %v781 = vmul.f32 %v775, %v779
  %783 = vrot.lane.b32.xlu0 %v781, 10
  %v784 = vpop.permute.xlu0 %783
  %v786 = vadd.f32 %v776, %v784
  %v787 = vtanh.pop %v786
  %789 = vrot.lane.b32.xlu0 %v787, 10
  %v790 = vpop.permute.xlu0 %789
  %v792 = vmul.f32 %v775, %v790
  %v793 = vld [vmem:[%s4] sm:$0xf]
  %v794 = vld [vmem:[%s4 + $0x4] sm:$0xf]
  %v795 = vld [vmem:[%s4 + $0x8] sm:$0xf]
  %v796 = vld [vmem:[%s4 + $0xc] sm:$0xf]
  %v797 = vld [vmem:[%s4 + $0x10] sm:$0xf]
  %v798 = vld [vmem:[%s4 + $0x14] sm:$0x1]
  %v799 = vld [vmem:[%s5] sm:$0x1]
  %v801 = vlaneseq
  %v802 = vshrl.u32 %v801, 7
  %v803 = vsub.s32 0, %v802
  %v804 = vrot.slane %v799, %v803
  %v812 = vunpack.c.l.b16 %v793
  %v813 = vunpack.c.l.b16 %v794
  %v814 = vunpack.c.l.b16 %v795
  %v815 = vunpack.c.l.b16 %v796
  %v816 = vunpack.c.l.b16 %v797
  %v817 = vunpack.c.l.b16 %v798
  %v818 = vpack.c.b16 %v813, %v812
  %v819 = vpack.c.b16 %v815, %v814
  %v820 = vpack.c.b16 %v817, %v816
  %v824 = vsel %vm95, %v42, 0
  %v827 = vand.u32 %v820, %v111
  %829 = vmatprep.subr.bf16.mxu0 0
  %830 = vmatpush1.bf16.msra.mxu0 %v818
  %831 = vmatprep.subr.bf16.mxu0 0
  %832 = vmatpush1.bf16.msra.mxu0 %v819
  %833 = vmatprep.subr.bf16.mxu0 0
  %834 = vmatpush1.bf16.msra.mxu0 %v827
  %835 = vmatprep.subr.bf16.mxu0 0
  %836 = vmatpush1.bf16.msra.mxu0 0
  %837 = vmatprep.subr.bf16.mxu0 0
  %838 = vmatpush1.bf16.msra.mxu0 0
  %839 = vmatprep.subr.bf16.mxu0 0
  %840 = vmatpush1.bf16.msra.mxu0 0
  %841 = vmatprep.subr.bf16.mxu0 0
  %842 = vmatpush1.bf16.msra.mxu0 0
  %843 = vmatprep.subr.bf16.mxu0 0
  %844 = vmatpush1.bf16.msra.mxu0 0
  %845 = vmatprep.subr.bf16.mxu0 0
  %846 = vmatpush1.bf16.msra.mxu0 0
  %847 = vmatprep.subr.bf16.mxu0 0
  %848 = vmatpush1.bf16.msra.mxu0 0
  %849 = vmatprep.subr.bf16.mxu0 0
  %850 = vmatpush1.bf16.msra.mxu0 0
  %851 = vmatprep.subr.bf16.mxu0 0
  %852 = vmatpush1.bf16.msra.mxu0 0
  %853 = vmatprep.subr.bf16.mxu0 0
  %854 = vmatpush1.bf16.msra.mxu0 0
  %855 = vmatprep.subr.bf16.mxu0 0
  %856 = vmatpush1.bf16.msra.mxu0 0
  %857 = vmatprep.subr.bf16.mxu0 0
  %858 = vmatpush1.bf16.msra.mxu0 0
  %859 = vmatprep.subr.bf16.mxu0 0
  %860 = vmatpush1.bf16.msra.mxu0 0
  %861 = vmatprep.mubr.bf16.mxu0 0
  %862 = vmatmul.mubr.bf16.gmra.mrb[0].mxu0 %v824
  %v863 = vpop.f32.mrb[0].mxu0
  %v864 = vadd.f32 %v804, %v863
  %v865 = vpop.f32.mrb[0].mxu0
  %v866 = vpop.f32.mrb[0].mxu0
  %v867 = vpop.f32.mrb[0].mxu0
  %868 = vdwg.mxu0
  %v869 = vmul.f32 %v864, 2.0
  %v870 = vsel %vm34, %v864, %v869
  %v871 = vxor.u32 %v870, 2147483648
  %v872 = vmul.f32 %v871, 1.442695
  %v873 = vpow.pop %v872
  %v874 = vadd.f32 %v873, 1.0
  %v875 = vrcp.pop %v874
  %v876 = vmul.f32 1.0, %v875
  %v877 = vmul.f32 %v876, 2.0
  %v878 = vsub.f32 %v877, 1.0
  %v879 = vsel %vm34, %v876, %v878
  %881 = vrot.lane.b32.xlu0 %v879, 98
  %v882 = vpop.permute.xlu0 %881
  %v884 = vmul.f32 %v879, %v882
  %v885 = vtanh.pop %v884
  %887 = vrot.lane.b32.xlu0 %v885, 20
  %v888 = vpop.permute.xlu0 %887
  %v890 = vmul.f32 %v879, %v888
  %892 = vrot.lane.b32.xlu0 %v792, 108
  %v893 = vpop.permute.xlu0 %892
  %896 = vrot.lane.b32.xlu0 %v890, 118
  %v897 = vpop.permute.xlu0 %896
  %v899 = vsel %vm185, %v893, %v897
  %v900 = vld [vmem:[%s6] sm:$0xff]
  %v901 = vld [vmem:[%s6 + $0x8] sm:$0xff]
  %v902 = vld [vmem:[%s6 + $0x10] sm:$0xf]
  %v903 = vld [vmem:[#allocation2] sm:$0x1]
  %v905 = vlaneseq
  %v906 = vshrl.u32 %v905, 7
  %v907 = vsub.s32 0, %v906
  %v908 = vrot.slane %v903, %v907
  %vm910 = vcmask 162816
  %v912 = vsel %vm910, %v899, 0
  %v915 = vsel %vm108, %v902, 0
  %917 = vmatprep.subr.mxu0 0.0
  %918 = vmatpush1.msra.mxu0 %v900
  %919 = vmatprep.subr.mxu0 0.0
  %920 = vmatpush1.msra.mxu0 %v901
  %921 = vmatprep.subr.mxu0 0.0
  %922 = vmatpush1.msra.mxu0 %v915
  %923 = vmatprep.subr.mxu0 0.0
  %924 = vmatpush1.msra.mxu0 0.0
  %925 = vmatprep.subr.mxu0 0.0
  %926 = vmatpush1.msra.mxu0 0.0
  %927 = vmatprep.subr.mxu0 0.0
  %928 = vmatpush1.msra.mxu0 0.0
  %929 = vmatprep.subr.mxu0 0.0
  %930 = vmatpush1.msra.mxu0 0.0
  %931 = vmatprep.subr.mxu0 0.0
  %932 = vmatpush1.msra.mxu0 0.0
  %933 = vmatprep.subr.mxu0 0.0
  %934 = vmatpush1.msra.mxu0 0.0
  %935 = vmatprep.subr.mxu0 0.0
  %936 = vmatpush1.msra.mxu0 0.0
  %937 = vmatprep.subr.mxu0 0.0
  %938 = vmatpush1.msra.mxu0 0.0
  %939 = vmatprep.subr.mxu0 0.0
  %940 = vmatpush1.msra.mxu0 0.0
  %941 = vmatprep.subr.mxu0 0.0
  %942 = vmatpush1.msra.mxu0 0.0
  %943 = vmatprep.subr.mxu0 0.0
  %944 = vmatpush1.msra.mxu0 0.0
  %945 = vmatprep.subr.mxu0 0.0
  %946 = vmatpush1.msra.mxu0 0.0
  %947 = vmatprep.subr.mxu0 0.0
  %948 = vmatpush1.msra.mxu0 0.0
  %949 = vmatprep.subr.mxu0 0.0
  %950 = vmatpush1.msra.mxu0 0.0
  %951 = vmatprep.subr.mxu0 0.0
  %952 = vmatpush1.msra.mxu0 0.0
  %953 = vmatprep.subr.mxu0 0.0
  %954 = vmatpush1.msra.mxu0 0.0
  %955 = vmatprep.subr.mxu0 0.0
  %956 = vmatpush1.msra.mxu0 0.0
  %957 = vmatprep.subr.mxu0 0.0
  %958 = vmatpush1.msra.mxu0 0.0
  %959 = vmatprep.subr.mxu0 0.0
  %960 = vmatpush1.msra.mxu0 0.0
  %961 = vmatprep.subr.mxu0 0.0
  %962 = vmatpush1.msra.mxu0 0.0
  %963 = vmatprep.subr.mxu0 0.0
  %964 = vmatpush1.msra.mxu0 0.0
  %965 = vmatprep.subr.mxu0 0.0
  %966 = vmatpush1.msra.mxu0 0.0
  %967 = vmatprep.subr.mxu0 0.0
  %968 = vmatpush1.msra.mxu0 0.0
  %969 = vmatprep.subr.mxu0 0.0
  %970 = vmatpush1.msra.mxu0 0.0
  %971 = vmatprep.subr.mxu0 0.0
  %972 = vmatpush1.msra.mxu0 0.0
  %973 = vmatprep.subr.mxu0 0.0
  %974 = vmatpush1.msra.mxu0 0.0
  %975 = vmatprep.subr.mxu0 0.0
  %976 = vmatpush1.msra.mxu0 0.0
  %977 = vmatprep.subr.mxu0 0.0
  %978 = vmatpush1.msra.mxu0 0.0
  %979 = vmatprep.subr.mxu0 0.0
  %980 = vmatpush1.msra.mxu0 0.0
  %981 = vmatprep.mubr.f32.mxu0 0.0
  %982 = vmatmul.mubr.f32.gmra.mrb[0].mxu0 %v912
  %v983 = vpop.f32.mrb[0].mxu0
  %v984 = vadd.f32 %v908, %v983
  %v985 = vpop.f32.mrb[0].mxu0
  %986 = vdwg.mxu0
  %v987 = vxor.u32 %v984, 2147483648
  %v988 = vmul.f32 %v987, 1.442695
  %v989 = vpow.pop %v988
  %v990 = vadd.f32 %v989, 1.0
  %v991 = vrcp.pop %v990
  %v992 = vmul.f32 1.0, %v991
  %vm993 = vcmask 7168
  %994 = vst.msk [vmem:[%s8] sm:$0xff] %vm993, %v992
  // Predicated region
  $region34: #{tpu_custom_call.1} parent=0 // pred_check
    _
  $region35: #{tpu_custom_call.1} parent=0 // pred_check_branch
    %996 = sbr.rel (0) target = $region37
  $region36: #{tpu_custom_call.1} parent=0 // pred_region
    _
  $region37: #{tpu_custom_call.1} parent=0 // pred_fallthru
    _
  // Predicated region
  $region38: #{tpu_custom_call.1} parent=0 // pred_check
    _
  $region39: #{tpu_custom_call.1} parent=0 // pred_check_branch
    %998 = sbr.rel (0) target = $region41
  $region40: #{tpu_custom_call.1} parent=0 // pred_region
    _
  $region41: #{tpu_custom_call.1} parent=0 // pred_fallthru
    _

</llo_original>
